<compile_context>
chip_gen: v5e
topology: v5e:2x2
jax: 0.10.0
libtpu: 0.0.40
codegen_flags: <defaults>
</compile_context>

<pallas_src>
import functools

import jax
import jax.numpy as jnp
from jax import lax
from jax.experimental import pallas as pl
from jax.experimental.pallas import tpu as pltpu


def _round_up(x, m):
    return ((x + m - 1) // m) * m


def _auto_token_tile(seq_len, k_pad, requested):
    """Bound the (Kp, tile) f32 temporaries (score, one-hot, iota, masks ≈ 5
    buffers) to ~10 MiB so they fit comfortably even on v7x (64 MiB VMEM)."""
    cap = min(1024, max(128, ((1 << 19) // max(k_pad, 1)) // 128 * 128))
    tile = min(int(requested), cap)
    if seq_len <= tile:
        return seq_len
    return max(128, (tile // 128) * 128)


def _default_vmem_limit():
    """Scoped-VMEM budget: ~48 MiB on v7x (64 MiB physical), up to 96 MiB on
    v5e/v6e (128 MiB physical); always above the 16/32 MiB defaults."""
    phys = 64 << 20
    try:
        phys = int(getattr(pltpu.get_tpu_info(), "vmem_capacity_bytes", phys))
    except Exception:
        pass
    return max(32 << 20, min(96 << 20, phys - (16 << 20)))


def _vq_kernel(x_ref, cba_ref, cbt_ref, zq_ref, idx_ref, stats_ref,
               *, seq_len, ragged, dist_dtype):
    """One (batch, token-tile) grid step.

    x_ref    : (1, D, TT)    input tokens (channels on sublanes, tokens on lanes)
    cba_ref  : (Kp, D+1)     [-2*codebook | ||c||^2], VMEM resident, dist_dtype
    cbt_ref  : (D, Kp)       zero-padded codebook^T (f32), VMEM resident
    zq_ref   : (1, D, TT)    quantized output tile
    idx_ref  : (1, 1, 1, TT) int32 code indices (lane-dense)
    stats_ref: (1, 1, 2, Kp) row 0 = per-tile code counts, row 1 lane 0 = SSE
    """
    x = x_ref[0]                                          # (D, TT)
    cba = cba_ref[...]                                    # (Kp, D+1)
    cbt = cbt_ref[...]                                    # (D, Kp)
    TT = x.shape[1]
    Kp = cba.shape[0]

    # score[k, t] = ||c_k||^2 - 2 c_k . x_t   — one MXU pass; the +||c_k||^2
    # bias rides along as an extra contraction column against a ones row.
    x_aug = jnp.concatenate(
        [x.astype(dist_dtype), jnp.ones((1, TT), dtype=dist_dtype)], axis=0)
    score = jnp.dot(cba, x_aug, preferred_element_type=jnp.float32)  # (Kp, TT)

    # argmin over codes (first-index tie-break, like torch.argmin).
    min_val = jnp.min(score, axis=0, keepdims=True)                  # (1, TT)
    iota_k = lax.broadcasted_iota(jnp.int32, (Kp, TT), 0)
    idx = jnp.min(jnp.where(score == min_val, iota_k, Kp), axis=0)   # (TT,)
    idx_ref[0, 0, 0] = idx

    # dequantize: z_q[:, t] = codebook[idx[t]] via one-hot matmul (MXU, f32).
    onehot = (iota_k == idx[None, :]).astype(jnp.float32)            # (Kp, TT)
    z_q = jnp.dot(cbt, onehot, preferred_element_type=jnp.float32)   # (D, TT)
    zq_ref[0] = z_q.astype(zq_ref.dtype)

    # Per-tile partial reductions (commit-loss SSE + code-usage counts).
    diff = z_q - x.astype(jnp.float32)                               # (D, TT)
    if ragged:                                   # static: only pay for masking
        t0 = pl.program_id(1) * TT               # when T % tile != 0
        col = t0 + lax.broadcasted_iota(jnp.int32, (1, TT), 1)
        valid = col < seq_len
        diff = jnp.where(valid, diff, 0.0)
        onehot = jnp.where(valid, onehot, 0.0)

    stats_ref[0, 0, 0] = jnp.sum(onehot, axis=1)                     # (Kp,)
    lane = lax.broadcasted_iota(jnp.int32, (1, Kp), 1)
    sse_row = jnp.where(lane == 0, jnp.sum(diff * diff), 0.0)        # (1, Kp)
    stats_ref[0, 0, 1] = sse_row[0]


def quantizer_forward(z, codebook, beta, *, token_tile=1024,
                      dist_dtype=jnp.float32):
    """Pallas forward of Quantizer.

    z        : (N, e_dim, T) float32 or bfloat16 — the module's native layout
    codebook : (n_e, e_dim)  — embedding.weight
    returns  : (z_q, loss, perplexity, code_idx); the first three match
               Quantizer.forward, code_idx ((N*T,) int32, row-major over
               (N, T)) matches Quantizer.quantize.
    """
    N, D, T = z.shape
    K, D2 = codebook.shape
    assert D == D2, "channel dim must equal e_dim"
    assert dist_dtype in (jnp.float32, jnp.bfloat16)

    if z.dtype not in (jnp.float32, jnp.bfloat16):
        z = z.astype(jnp.float32)

    cb = codebook.astype(jnp.float32)
    Kp = _round_up(K, 128)

    # Augmented codebook: [ -2*c_k | ||c_k||^2 ] . [ x_t | 1 ] = the squared
    # distance minus the per-token ||x_t||^2 constant (argmin-equivalent).
    c2 = jnp.sum(cb * cb, axis=1, keepdims=True)                    # (K, 1)
    cb_aug = jnp.concatenate([-2.0 * cb, c2], axis=1)               # (K, D+1)
    if Kp > K:
        # Padded rows carry a huge bias so they never win the argmin.
        pad = jnp.zeros((Kp - K, D + 1), jnp.float32).at[:, D].set(1e30)
        cb_aug = jnp.concatenate([cb_aug, pad], axis=0)             # (Kp, D+1)
    cb_aug = cb_aug.astype(dist_dtype)
    # f32 transposed (zero-padded) codebook for the exact one-hot dequant.
    cbT = jnp.zeros((D, Kp), jnp.float32).at[:, :K].set(cb.T)       # (D, Kp)

    tt = _auto_token_tile(T, Kp, token_tile)
    n_t = pl.cdiv(T, tt)
    ragged = (T % tt) != 0

    kernel = functools.partial(_vq_kernel, seq_len=T, ragged=ragged,
                               dist_dtype=dist_dtype)

    z_q, idx, stats = pl.pallas_call(
        kernel,
        grid=(N, n_t),
        out_shape=(
            jax.ShapeDtypeStruct((N, D, T), z.dtype),                # z_q
            jax.ShapeDtypeStruct((N, n_t, 1, tt), jnp.int32),        # indices
            jax.ShapeDtypeStruct((N, n_t, 2, Kp), jnp.float32),      # counts+SSE
        ),
        in_specs=[
            pl.BlockSpec((1, D, tt), lambda n, t: (n, 0, t)),        # z tile
            # Constant (VMEM-resident) codebook blocks; index_map is (0, 0) so
            # they are DMA'd once.
            # TODO(synk): pipeline_mode=pl.Buffered(1) would halve their VMEM
            # footprint for very large codebooks; left default for portability.
            pl.BlockSpec((Kp, D + 1), lambda n, t: (0, 0)),          # aug. codebook
            pl.BlockSpec((D, Kp), lambda n, t: (0, 0)),              # codebook^T
        ],
        out_specs=(
            pl.BlockSpec((1, D, tt), lambda n, t: (n, 0, t)),
            pl.BlockSpec((1, 1, 1, tt), lambda n, t: (n, t, 0, 0)),
            pl.BlockSpec((1, 1, 2, Kp), lambda n, t: (n, t, 0, 0)),
        ),
        compiler_params=pltpu.CompilerParams(
            # TODO(synk): for tiny-N inference on v7x, a flattened (N*n_t,)
            # grid would balance the 2 TensorCores better.
            dimension_semantics=("parallel", "parallel"),
            vmem_limit_bytes=_default_vmem_limit(),
        ),
    )(z, cb_aug, cbT)

    # Tiny final reductions in XLA: loss, perplexity, flat code indices.
    M = N * T
    stats_sum = jnp.sum(stats, axis=(0, 1))                          # (2, Kp)
    sse = stats_sum[1, 0]
    counts = stats_sum[0, :K]
    mse = sse / jnp.float32(M * D)
    loss = (1.0 + beta) * mse
    e_mean = counts / jnp.float32(M)
    perplexity = jnp.exp(-jnp.sum(e_mean * jnp.log(e_mean + 1e-10)))
    code_idx = idx.reshape(N, n_t * tt)[:, :T].reshape(-1)           # (M,)
    return z_q, loss, perplexity, code_idx


def _reference(z, codebook, beta):
    """Pure-JAX transcription of Quantizer.forward."""
    N, D, T = z.shape
    zf = jnp.transpose(z, (0, 2, 1)).reshape(-1, D)
    d = (jnp.sum(zf ** 2, axis=1, keepdims=True)
         + jnp.sum(codebook ** 2, axis=1)[None, :]
         - 2.0 * zf @ codebook.T)
    idx = jnp.argmin(d, axis=1)
    z_q_rows = codebook[idx]
    loss = (1.0 + beta) * jnp.mean((z_q_rows - zf) ** 2)
    onehot = jax.nn.one_hot(idx, codebook.shape[0], dtype=jnp.float32)
    e_mean = jnp.mean(onehot, axis=0)
    ppl = jnp.exp(-jnp.sum(e_mean * jnp.log(e_mean + 1e-10)))
    z_q = jnp.transpose(z_q_rows.reshape(N, T, D), (0, 2, 1))
    return z_q, loss, ppl, idx


if __name__ == "__main__":
    # Module config (kept small): n_e codes of dimension e_dim, beta = 0.25.
    n_e, e_dim, beta = 64, 32, 0.25
    N, T = 2, 8

    key = jax.random.PRNGKey(0)
    kz, kc = jax.random.split(key)
    z = jax.random.normal(kz, (N, e_dim, T), dtype=jnp.float32)
    # Trained-codebook stand-in (the module's uniform(-1/n_e, 1/n_e) init makes
    # all codes nearly identical, which is a degenerate quantization test).
    codebook = jax.random.normal(kc, (n_e, e_dim), dtype=jnp.float32)

    z_q, loss, perplexity, code_idx = quantizer_forward(z, codebook, beta)
    jax.block_until_ready((z_q, loss, perplexity, code_idx))

    # Check against the pure-JAX reference of the PyTorch module.
    r_zq, r_loss, r_ppl, r_idx = _reference(z, codebook, beta)
    assert z_q.shape == (N, e_dim, T)
    assert jnp.array_equal(code_idx, r_idx)
    assert jnp.allclose(z_q, r_zq, atol=1e-5)
    assert jnp.allclose(loss, r_loss, atol=1e-5, rtol=1e-5)
    assert jnp.allclose(perplexity, r_ppl, atol=1e-4, rtol=1e-4)

    print("KERNEL_OK")
</pallas_src>

<mosaic_0001>
module attributes {stable_mosaic.version = 11 : i64} {
  func.func @_vq_kernel(%arg0: i32, %arg1: i32, %arg2: memref<1x32x8xf32, #tpu.memory_space<vmem>>, %arg3: memref<128x33xf32, #tpu.memory_space<vmem>>, %arg4: memref<32x128xf32, #tpu.memory_space<vmem>>, %arg5: memref<1x32x8xf32, #tpu.memory_space<vmem>>, %arg6: memref<1x1x1x8xi32, #tpu.memory_space<vmem>>, %arg7: memref<1x1x2x128xf32, #tpu.memory_space<vmem>>) attributes {dimension_semantics = [#tpu.dimension_semantics<parallel>, #tpu.dimension_semantics<parallel>], iteration_bounds = array<i64: 2, 1>, scalar_prefetch = 0 : i64, scratch_operands = 0 : i64, tpu.core_type = #tpu.core_type<tc>, window_params = [{transform_indices = @transform_0, window_bounds = array<i64: 1, 32, 8>}, {pipeline_mode = #tpu.pipeline_mode<synchronous>, transform_indices = @transform_1, window_bounds = array<i64: 128, 33>}, {pipeline_mode = #tpu.pipeline_mode<synchronous>, transform_indices = @transform_2, window_bounds = array<i64: 32, 128>}, {transform_indices = @transform_3, window_bounds = array<i64: 1, 32, 8>}, {transform_indices = @transform_4, window_bounds = array<i64: 1, 1, 1, 8>}, {transform_indices = @transform_5, window_bounds = array<i64: 1, 1, 2, 128>}]} {
    %c0 = arith.constant 0 : index
    %c0_0 = arith.constant 0 : index
    %c0_1 = arith.constant 0 : index
    %0 = vector.load %arg2[%c0, %c0_0, %c0_1] : memref<1x32x8xf32, #tpu.memory_space<vmem>>, vector<1x32x8xf32>
    %1 = vector.shape_cast %0 : vector<1x32x8xf32> to vector<32x8xf32>
    %c0_2 = arith.constant 0 : index
    %c0_3 = arith.constant 0 : index
    %2 = vector.load %arg3[%c0_2, %c0_3] : memref<128x33xf32, #tpu.memory_space<vmem>>, vector<128x33xf32>
    %c0_4 = arith.constant 0 : index
    %c0_5 = arith.constant 0 : index
    %3 = vector.load %arg4[%c0_4, %c0_5] : memref<32x128xf32, #tpu.memory_space<vmem>>, vector<32x128xf32>
    %cst = arith.constant 1.000000e+00 : f32
    %4 = vector.broadcast %cst : f32 to vector<1x8xf32>
    %5 = tpu.concatenate %1, %4 in 0 : vector<32x8xf32>, vector<1x8xf32> -> vector<33x8xf32>
    %cst_6 = arith.constant dense<0.000000e+00> : vector<128x8xf32>
    %6 = tpu.matmul %2, %5, %cst_6 {dimension_numbers = #tpu.dot_dimension_numbers<[1], [0], [0], [1], [0, 0, 1, 1], [], []>} : vector<128x33xf32>, vector<33x8xf32>, vector<128x8xf32> -> vector<128x8xf32>
    %cst_7 = arith.constant dense<0x7F800000> : vector<8xf32>
    %7 = vector.multi_reduction <minimumf>, %6, %cst_7 [0] : vector<128x8xf32> to vector<8xf32>
    %8 = vector.shape_cast %7 : vector<8xf32> to vector<1x8xf32>
    %9 = tpu.iota {dimensions = array<i32: 0>} : vector<128x8xi32>
    %10 = vector.broadcast %8 : vector<1x8xf32> to vector<128x8xf32>
    %11 = arith.cmpf oeq, %6, %10 : vector<128x8xf32>
    %c128_i32 = arith.constant 128 : i32
    %12 = vector.broadcast %c128_i32 : i32 to vector<128x8xi32>
    %13 = arith.select %11, %9, %12 : vector<128x8xi1>, vector<128x8xi32>
    %cst_8 = arith.constant dense<2147483647> : vector<8xi32>
    %14 = vector.multi_reduction <minsi>, %13, %cst_8 [0] : vector<128x8xi32> to vector<8xi32>
    %c0_9 = arith.constant 0 : index
    %c0_10 = arith.constant 0 : index
    %c0_11 = arith.constant 0 : index
    %c0_12 = arith.constant 0 : index
    %15 = vector.load %arg6[%c0_9, %c0_10, %c0_11, %c0_12] : memref<1x1x1x8xi32, #tpu.memory_space<vmem>>, vector<1x1x1x8xi32>
    %16 = vector.shape_cast %15 : vector<1x1x1x8xi32> to vector<8xi32>
    %17 = vector.shape_cast %14 : vector<8xi32> to vector<1x1x1x8xi32>
    tpu.vector_store %arg6[%c0_9, %c0_10, %c0_11, %c0_12], %17 {strides = array<i32>} : memref<1x1x1x8xi32, #tpu.memory_space<vmem>>, vector<1x1x1x8xi32>,
    %18 = vector.shape_cast %14 : vector<8xi32> to vector<1x8xi32>
    %19 = vector.broadcast %18 : vector<1x8xi32> to vector<128x8xi32>
    %20 = arith.cmpi eq, %9, %19 : vector<128x8xi32>
    %21 = arith.extui %20 : vector<128x8xi1> to vector<128x8xi32>
    %22 = arith.sitofp %21 : vector<128x8xi32> to vector<128x8xf32>
    %cst_13 = arith.constant dense<0.000000e+00> : vector<32x8xf32>
    %23 = tpu.matmul %3, %22, %cst_13 {dimension_numbers = #tpu.dot_dimension_numbers<[1], [0], [0], [1], [0, 0, 1, 1], [], []>} : vector<32x128xf32>, vector<128x8xf32>, vector<32x8xf32> -> vector<32x8xf32>
    %c0_14 = arith.constant 0 : index
    %c0_15 = arith.constant 0 : index
    %c0_16 = arith.constant 0 : index
    %24 = vector.load %arg5[%c0_14, %c0_15, %c0_16] : memref<1x32x8xf32, #tpu.memory_space<vmem>>, vector<1x32x8xf32>
    %25 = vector.shape_cast %24 : vector<1x32x8xf32> to vector<32x8xf32>
    %26 = vector.shape_cast %23 : vector<32x8xf32> to vector<1x32x8xf32>
    tpu.vector_store %arg5[%c0_14, %c0_15, %c0_16], %26 {strides = array<i32>} : memref<1x32x8xf32, #tpu.memory_space<vmem>>, vector<1x32x8xf32>,
    %27 = arith.subf %23, %1 : vector<32x8xf32>
    %cst_17 = arith.constant dense<0.000000e+00> : vector<128xf32>
    %28 = vector.multi_reduction <add>, %22, %cst_17 [1] : vector<128x8xf32> to vector<128xf32>
    %c0_18 = arith.constant 0 : index
    %c0_19 = arith.constant 0 : index
    %c0_20 = arith.constant 0 : index
    %c0_21 = arith.constant 0 : index
    %29 = vector.load %arg7[%c0_18, %c0_19, %c0_20, %c0_21] : memref<1x1x2x128xf32, #tpu.memory_space<vmem>>, vector<1x1x1x128xf32>
    %30 = vector.shape_cast %29 : vector<1x1x1x128xf32> to vector<128xf32>
    %31 = vector.shape_cast %28 : vector<128xf32> to vector<1x1x1x128xf32>
    tpu.vector_store %arg7[%c0_18, %c0_19, %c0_20, %c0_21], %31 {strides = array<i32>} : memref<1x1x2x128xf32, #tpu.memory_space<vmem>>, vector<1x1x1x128xf32>,
    %32 = tpu.iota {dimensions = array<i32: 1>} : vector<1x128xi32>
    %c0_i32 = arith.constant 0 : i32
    %33 = vector.broadcast %c0_i32 : i32 to vector<1x128xi32>
    %34 = arith.cmpi eq, %32, %33 : vector<1x128xi32>
    %35 = arith.mulf %27, %27 : vector<32x8xf32>
    %36 = vector.shape_cast %35 : vector<32x8xf32> to vector<1x32x8xf32>
    %cst_22 = arith.constant dense<0.000000e+00> : vector<1xf32>
    %37 = vector.multi_reduction <add>, %36, %cst_22 [1, 2] : vector<1x32x8xf32> to vector<1xf32>
    %38 = vector.shape_cast %37 : vector<1xf32> to vector<1x1x1xf32>
    %39 = vector.extract %38[0, 0, 0] : f32 from vector<1x1x1xf32>
    %cst_23 = arith.constant 0.000000e+00 : f32
    %40 = vector.broadcast %39 : f32 to vector<1x128xf32>
    %41 = vector.broadcast %cst_23 : f32 to vector<1x128xf32>
    %42 = arith.select %34, %40, %41 : vector<1x128xi1>, vector<1x128xf32>
    %43 = vector.shape_cast %42 : vector<1x128xf32> to vector<128xf32>
    %c0_24 = arith.constant 0 : index
    %c0_25 = arith.constant 0 : index
    %c1 = arith.constant 1 : index
    %c0_26 = arith.constant 0 : index
    %44 = vector.load %arg7[%c0_24, %c0_25, %c1, %c0_26] : memref<1x1x2x128xf32, #tpu.memory_space<vmem>>, vector<1x1x1x128xf32>
    %45 = vector.shape_cast %44 : vector<1x1x1x128xf32> to vector<128xf32>
    %46 = vector.shape_cast %43 : vector<128xf32> to vector<1x1x1x128xf32>
    tpu.vector_store %arg7[%c0_24, %c0_25, %c1, %c0_26], %46 {strides = array<i32>} : memref<1x1x2x128xf32, #tpu.memory_space<vmem>>, vector<1x1x1x128xf32>,
    return
  }
  func.func @transform_0(%arg0: i32, %arg1: i32) -> (i32, i32, i32) {
    %c0_i32 = arith.constant 0 : i32
    %c0_i32_0 = arith.constant 0 : i32
    return %arg0, %c0_i32, %arg1 : i32, i32, i32
  }
  func.func @transform_1(%arg0: i32, %arg1: i32) -> (i32, i32) {
    %c0_i32 = arith.constant 0 : i32
    %c0_i32_0 = arith.constant 0 : i32
    %c0_i32_1 = arith.constant 0 : i32
    return %c0_i32, %c0_i32_0 : i32, i32
  }
  func.func @transform_2(%arg0: i32, %arg1: i32) -> (i32, i32) {
    %c0_i32 = arith.constant 0 : i32
    %c0_i32_0 = arith.constant 0 : i32
    %c0_i32_1 = arith.constant 0 : i32
    return %c0_i32, %c0_i32_0 : i32, i32
  }
  func.func @transform_3(%arg0: i32, %arg1: i32) -> (i32, i32, i32) {
    %c0_i32 = arith.constant 0 : i32
    %c0_i32_0 = arith.constant 0 : i32
    return %arg0, %c0_i32, %arg1 : i32, i32, i32
  }
  func.func @transform_4(%arg0: i32, %arg1: i32) -> (i32, i32, i32, i32) {
    %c0_i32 = arith.constant 0 : i32
    %c0_i32_0 = arith.constant 0 : i32
    %c0_i32_1 = arith.constant 0 : i32
    return %arg0, %arg1, %c0_i32, %c0_i32_0 : i32, i32, i32, i32
  }
  func.func @transform_5(%arg0: i32, %arg1: i32) -> (i32, i32, i32, i32) {
    %c0_i32 = arith.constant 0 : i32
    %c0_i32_0 = arith.constant 0 : i32
    %c0_i32_1 = arith.constant 0 : i32
    return %arg0, %arg1, %c0_i32, %c0_i32_0 : i32, i32, i32, i32
  }
}

</mosaic_0001>

<llo_original>
// kernel: tpu_custom_call.1
$region0: #{tpu_custom_call.1}
  #allocation0 [shape = 'u32[]', space=smem, size = 0x4, offset = 0x4, fixed_abs, tag = 'smem constant byte address 0x4 - core index']
  #allocation1 [shape = 'u32[72,128]{1,0:T(1,128)}', space=vmem, size = 0x9000, scoped, tag = 'internal scratch']
  %s0 = inlined_call_operand.vmem [shape: f32[2,32,8], index: 0, kind: input, shape index: {}]
  %s1 = inlined_call_operand.vmem [shape: f32[128,33], index: 1, kind: input, shape index: {}]
  %s2 = inlined_call_operand.vmem [shape: f32[32,128], index: 2, kind: input, shape index: {}]
  %s3 = inlined_call_operand.vmem [shape: f32[2,32,8], index: 3, kind: output, shape index: {0}]
  %s4 = inlined_call_operand.hbm [shape: s32[2,1,1,8], index: 4, kind: output, shape index: {1}]
  %s5 = inlined_call_operand.hbm [shape: f32[2,1,2,128], index: 5, kind: output, shape index: {2}]
  %6 = xla_tuple %s3, %s4, %s5
  %s7 = sld [smem:[#allocation0]]
  $region61: #{tpu_custom_call.1} parent=0
    _
  %s9 = ssub.s32 1, %s7
  %s10 = scalar_select 0, %s9, %s7
  $region1: #{tpu_custom_call.1} parent=0
    #allocation2 [shape = 'u8[1024]{0}', space=vmem, size = 0x400, scoped, tag = 'output window, operand 1']
    #allocation3 [shape = 's32[2]{0}', space=sflag, size = 0x8, scoped, tag = 'scoped memory for tpu_custom_call.1']
    #allocation4 [shape = 'u8[2048]{0}', space=vmem, size = 0x800, scoped, tag = 'output window, operand 2']
    #allocation5 [shape = 's32[2]{0}', space=sflag, size = 0x8, scoped, tag = 'scoped memory for tpu_custom_call.1']
    %11 = vsyncpa [#allocation3], 0
    %s12 = scalar_lea.sflag [#allocation3], 1
    %13 = vsyncpa %s12, 0
    %14 = vsyncpa [#allocation5], 0
    %s15 = scalar_lea.sflag [#allocation5], 1
    %16 = vsyncpa %s15, 0
    loop: start=0, step=1, limit=4
    $region2: #{tpu_custom_call.1} parent=1 // loop_pre_header
      _
    $region3: #{tpu_custom_call.1} parent=1 // loop_header
      %s18 = sphi 0, %s22
      %p19 = scmp.ge.s32.totalorder %s18, 4
      %s25 = sphi 0, %s37
      %s26 = sphi 0, %s33
      %s27 = sphi 0, %s25
      %s28 = sphi 0, %s26
      %s29 = sphi 0, %s27
      %s30 = sphi 0, %s28
      %s42 = sphi 0, %s44
      %s45 = sphi 0, %s42
      %s46 = sphi 0, %s45
      %s62 = sphi 0, %s46
      %s66 = sphi 0, %s66
      %s68 = sphi 0, %s66
      %s69 = sphi 0, %s68
      %s83 = sphi 0, %s69
      %s87 = sphi 0, %s87
      %s89 = sphi 0, %s87
      %s90 = sphi 0, %s89
      %s104 = sphi 0, %s90
      %s112 = sphi 0, %s114
      %s115 = sphi 0, %s112
      %s116 = sphi 0, %s115
      %s132 = sphi 0, %s116
      %s140 = sphi 0, %s142
      %s143 = sphi 0, %s140
      %s144 = sphi 0, %s143
      %s160 = sphi 0, %s144
      %s168 = sphi 0, %s170
      %s171 = sphi 0, %s168
      %s172 = sphi 0, %s171
      %s188 = sphi 0, %s172
    $region4: #{tpu_custom_call.1} parent=1 // loop_header_branch
      %21 = sbr.rel (%p19) target = $region8
    $region5: #{tpu_custom_call.1} parent=1 // loop_body
      %s23 = ssub.s32 %s18, 1
      %s24 = ssub.s32 %s18, 2
      %s31 = sadd.s32 1, %s26
      %p32 = scmp.ge.s32.totalorder %s31, 1
      %s33 = scalar_select %p32, 0, %s31
      %s34 = sadd.s32 1, %s25
      %s35 = scalar_select %p32, %s34, %s25
      %p36 = scmp.ge.s32.totalorder %s35, 2
      %s37 = scalar_select %p36, 0, %s35
      %s38 = ssub.s32 %s25, %s37
      %s39 = ssub.s32 %s26, %s33
      %s40 = sor.u32 %s38, %s39
      %p41 = scmp.eq.s32.totalorder %s40, 0
      %s43 = sadd.s32 %s42, 1
      %s44 = scalar_select %p41, %s42, %s43
      %p47 = pneg %p41
      %p48 = scmp.eq.s32.totalorder %s18, 1
      %p49 = por %p47, %p48
      %p50 = scmp.ne.s32.totalorder %s42, %s45
      %p51 = scmp.eq.s32.totalorder %s18, 0
      %p52 = por %p50, %p51
      %p53 = scmp.ne.s32.totalorder %s42, %s45
      %p54 = scmp.eq.s32.totalorder %s23, 1
      %p55 = por %p53, %p54
      %p56 = scmp.ne.s32.totalorder %s45, %s46
      %p57 = scmp.eq.s32.totalorder %s23, 0
      %p58 = por %p56, %p57
      %p59 = scmp.ne.s32.totalorder %s45, %s46
      %p60 = scmp.eq.s32.totalorder %s24, 1
      %p61 = por %p59, %p60
      %p63 = scmp.ne.s32.totalorder %s46, %s62
      %p64 = scmp.eq.s32.totalorder %s24, 0
      %p65 = por %p63, %p64
      %s67 = sadd.s32 %s66, 1
      %p70 = scmp.eq.s32.totalorder %s18, 1
      %p71 = scmp.ne.s32.totalorder %s66, %s68
      %p72 = scmp.eq.s32.totalorder %s18, 0
      %p73 = por %p71, %p72
      %p74 = scmp.ne.s32.totalorder %s66, %s68
      %p75 = scmp.eq.s32.totalorder %s23, 1
      %p76 = por %p74, %p75
      %p77 = scmp.ne.s32.totalorder %s68, %s69
      %p78 = scmp.eq.s32.totalorder %s23, 0
      %p79 = por %p77, %p78
      %p80 = scmp.ne.s32.totalorder %s68, %s69
      %p81 = scmp.eq.s32.totalorder %s24, 1
      %p82 = por %p80, %p81
      %p84 = scmp.ne.s32.totalorder %s69, %s83
      %p85 = scmp.eq.s32.totalorder %s24, 0
      %p86 = por %p84, %p85
      %s88 = sadd.s32 %s87, 1
      %p91 = scmp.eq.s32.totalorder %s18, 1
      %p92 = scmp.ne.s32.totalorder %s87, %s89
      %p93 = scmp.eq.s32.totalorder %s18, 0
      %p94 = por %p92, %p93
      %p95 = scmp.ne.s32.totalorder %s87, %s89
      %p96 = scmp.eq.s32.totalorder %s23, 1
      %p97 = por %p95, %p96
      %p98 = scmp.ne.s32.totalorder %s89, %s90
      %p99 = scmp.eq.s32.totalorder %s23, 0
      %p100 = por %p98, %p99
      %p101 = scmp.ne.s32.totalorder %s89, %s90
      %p102 = scmp.eq.s32.totalorder %s24, 1
      %p103 = por %p101, %p102
      %p105 = scmp.ne.s32.totalorder %s90, %s104
      %p106 = scmp.eq.s32.totalorder %s24, 0
      %p107 = por %p105, %p106
      %s108 = ssub.s32 %s25, %s37
      %s109 = ssub.s32 %s26, %s33
      %s110 = sor.u32 %s108, %s109
      %p111 = scmp.eq.s32.totalorder %s110, 0
      %s113 = sadd.s32 %s112, 1
      %s114 = scalar_select %p111, %s112, %s113
      %p117 = pneg %p111
      %p118 = scmp.eq.s32.totalorder %s18, 1
      %p119 = por %p117, %p118
      %p120 = scmp.ne.s32.totalorder %s112, %s115
      %p121 = scmp.eq.s32.totalorder %s18, 0
      %p122 = por %p120, %p121
      %p123 = scmp.ne.s32.totalorder %s112, %s115
      %p124 = scmp.eq.s32.totalorder %s23, 1
      %p125 = por %p123, %p124
      %p126 = scmp.ne.s32.totalorder %s115, %s116
      %p127 = scmp.eq.s32.totalorder %s23, 0
      %p128 = por %p126, %p127
      %p129 = scmp.ne.s32.totalorder %s115, %s116
      %p130 = scmp.eq.s32.totalorder %s24, 1
      %p131 = por %p129, %p130
      %p133 = scmp.ne.s32.totalorder %s116, %s132
      %p134 = scmp.eq.s32.totalorder %s24, 0
      %p135 = por %p133, %p134
      %s136 = ssub.s32 %s25, %s37
      %s137 = ssub.s32 %s26, %s33
      %s138 = sor.u32 %s136, %s137
      %p139 = scmp.eq.s32.totalorder %s138, 0
      %s141 = sadd.s32 %s140, 1
      %s142 = scalar_select %p139, %s140, %s141
      %p145 = pneg %p139
      %p146 = scmp.eq.s32.totalorder %s18, 1
      %p147 = por %p145, %p146
      %p148 = scmp.ne.s32.totalorder %s140, %s143
      %p149 = scmp.eq.s32.totalorder %s18, 0
      %p150 = por %p148, %p149
      %p151 = scmp.ne.s32.totalorder %s140, %s143
      %p152 = scmp.eq.s32.totalorder %s23, 1
      %p153 = por %p151, %p152
      %p154 = scmp.ne.s32.totalorder %s143, %s144
      %p155 = scmp.eq.s32.totalorder %s23, 0
      %p156 = por %p154, %p155
      %p157 = scmp.ne.s32.totalorder %s143, %s144
      %p158 = scmp.eq.s32.totalorder %s24, 1
      %p159 = por %p157, %p158
      %p161 = scmp.ne.s32.totalorder %s144, %s160
      %p162 = scmp.eq.s32.totalorder %s24, 0
      %p163 = por %p161, %p162
      %s164 = ssub.s32 %s25, %s37
      %s165 = ssub.s32 %s26, %s33
      %s166 = sor.u32 %s164, %s165
      %p167 = scmp.eq.s32.totalorder %s166, 0
      %s169 = sadd.s32 %s168, 1
      %s170 = scalar_select %p167, %s168, %s169
      %p173 = pneg %p167
      %p174 = scmp.eq.s32.totalorder %s18, 1
      %p175 = por %p173, %p174
      %p176 = scmp.ne.s32.totalorder %s168, %s171
      %p177 = scmp.eq.s32.totalorder %s18, 0
      %p178 = por %p176, %p177
      %p179 = scmp.ne.s32.totalorder %s168, %s171
      %p180 = scmp.eq.s32.totalorder %s23, 1
      %p181 = por %p179, %p180
      %p182 = scmp.ne.s32.totalorder %s171, %s172
      %p183 = scmp.eq.s32.totalorder %s23, 0
      %p184 = por %p182, %p183
      %p185 = scmp.ne.s32.totalorder %s171, %s172
      %p186 = scmp.eq.s32.totalorder %s24, 1
      %p187 = por %p185, %p186
      %p189 = scmp.ne.s32.totalorder %s172, %s188
      %p190 = scmp.eq.s32.totalorder %s24, 0
      %p191 = por %p189, %p190
      %p192 = scmp.le.s32.totalorder 1, %s18
      %p193 = scmp.lt.s32.totalorder %s18, 3
      %p194 = pnand %p192, %p193
      %p195 = pneg %p194
      // Predicated region
      $region9: #{tpu_custom_call.1} parent=5 // pred_check
        _
      $region10: #{tpu_custom_call.1} parent=5 // pred_check_branch
        %197 = sbr.rel (%p194) target = $region12
      $region11: #{tpu_custom_call.1} parent=5 // pred_region
        %s198 = ssub.s32 %s18, 1
        // Predicated region
        $region13: #{tpu_custom_call.1} parent=11 // pred_check
          %p199 = pneg %p79
        $region14: #{tpu_custom_call.1} parent=11 // pred_check_branch
          %201 = sbr.rel (%p199) target = $region16
        $region15: #{tpu_custom_call.1} parent=11 // pred_region
          _
        $region16: #{tpu_custom_call.1} parent=11 // pred_fallthru
          _
        // Predicated region
        $region17: #{tpu_custom_call.1} parent=11 // pred_check
          %p202 = pneg %p100
        $region18: #{tpu_custom_call.1} parent=11 // pred_check_branch
          %204 = sbr.rel (%p202) target = $region20
        $region19: #{tpu_custom_call.1} parent=11 // pred_region
          _
        $region20: #{tpu_custom_call.1} parent=11 // pred_fallthru
          _
      $region12: #{tpu_custom_call.1} parent=5 // pred_fallthru
        _
      %p205 = scmp.lt.s32.totalorder %s18, 2
      // Predicated region
      $region21: #{tpu_custom_call.1} parent=5 // pred_check
        %p206 = pneg %p205
      $region22: #{tpu_custom_call.1} parent=5 // pred_check_branch
        %208 = sbr.rel (%p206) target = $region24
      $region23: #{tpu_custom_call.1} parent=5 // pred_region
        // Predicated region
        $region25: #{tpu_custom_call.1} parent=23 // pred_check
          %p209 = pneg %p52
        $region26: #{tpu_custom_call.1} parent=23 // pred_check_branch
          %211 = sbr.rel (%p209) target = $region28
        $region27: #{tpu_custom_call.1} parent=23 // pred_region
          %p212 = scmp.lt.s32.totalorder %s25, 1
          %s213 = scalar_select %p212, %s25, 1
          %p214 = scmp.lt.s32.totalorder %s26, 0
          %s215 = scalar_select %p214, %s26, 0
          %s216 = smul.addr %s213, 4
          %s217 = sadd.s32 %s215, %s216
          %s218 = smul.addr %s217, 8
          %s219 = scalar_lea.vmem %s0, %s218
        $region28: #{tpu_custom_call.1} parent=23 // pred_fallthru
          _
      $region24: #{tpu_custom_call.1} parent=5 // pred_fallthru
        _
      %p220 = scmp.le.s32.totalorder 1, %s18
      %p221 = scmp.lt.s32.totalorder %s18, 3
      %p222 = pnand %p220, %p221
      %p223 = pneg %p222
      // Predicated region
      $region29: #{tpu_custom_call.1} parent=5 // pred_check
        _
      $region30: #{tpu_custom_call.1} parent=5 // pred_check_branch
        %225 = sbr.rel (%p222) target = $region32
      $region31: #{tpu_custom_call.1} parent=5 // pred_region
        %s226 = ssub.s32 %s18, 1
        %p227 = scmp.lt.s32.totalorder %s27, 1
        %s228 = scalar_select %p227, %s27, 1
        %p229 = scmp.lt.s32.totalorder %s28, 0
        %s230 = scalar_select %p229, %s28, 0
        %s231 = smul.addr %s228, 4
        %s232 = sadd.s32 %s230, %s231
        %s233 = smul.addr %s232, 8
        %s234 = scalar_lea.vmem %s0, %s233
        %p235 = pneg %p58
        %p236 = pneg %p55
        %p237 = pneg %p79
        %p238 = pneg %p76
        %p239 = pneg %p100
        %p240 = pneg %p97
        %p241 = pneg %p128
        %p242 = pneg %p125
        %p243 = scmp.lt.s32.totalorder %s27, 1
        %s244 = scalar_select %p243, %s27, 1
        %p245 = scmp.lt.s32.totalorder %s28, 0
        %s246 = scalar_select %p245, %s28, 0
        %s247 = smul.addr %s244, 4
        %s248 = sadd.s32 %s246, %s247
        %s249 = smul.addr %s248, 8
        %s250 = scalar_lea.vmem %s3, %s249
        %p251 = pneg %p156
        %p252 = pneg %p153
        %s253 = sand.u32 %s143, 1
        %s254 = scalar_lea.sflag [#allocation3], %s253
        %s255 = sand.u32 %s143, 1
        %s256 = scalar_lea.vmem [#allocation2], %s255
        %p257 = pneg %p184
        %p258 = pneg %p181
        %s259 = sand.u32 %s171, 1
        %s260 = scalar_lea.sflag [#allocation5], %s259
        %s261 = sand.u32 %s171, 1
        %s262 = smul.addr %s261, 2
        %s263 = scalar_lea.vmem [#allocation4], %s262
        %p264 = scmp.lt.s32.totalorder %s27, 1
        %s265 = scalar_select %p264, %s27, 1
        %p266 = scmp.lt.s32.totalorder %s28, 0
        %s267 = scalar_select %p266, %s28, 0
        %s268 = smul.addr %s265, 4
        %s269 = sadd.s32 %s267, %s268
        %s270 = smul.addr %s269, 8
        %s271 = scalar_lea.vmem %s0, %s270
        %p272 = scmp.lt.s32.totalorder %s27, 1
        %s273 = scalar_select %p272, %s27, 1
        %p274 = scmp.lt.s32.totalorder %s28, 0
        %s275 = scalar_select %p274, %s28, 0
        %s276 = smul.addr %s273, 4
        %s277 = sadd.s32 %s275, %s276
        %s278 = smul.addr %s277, 8
        %s279 = scalar_lea.vmem %s3, %s278
        %v280 = vld [vmem:[%s271] sm:$0xff]
        %v281 = vld [vmem:[%s271 + $0x8] sm:$0xff]
        %v282 = vld [vmem:[%s271 + $0x10] sm:$0xff]
        %v283 = vld [vmem:[%s271 + $0x18] sm:$0xff]
        %v284 = vld [vmem:[%s1] sm:$0xff]
        %v285 = vld [vmem:[%s1 + $0x8] sm:$0xff]
        %v286 = vld [vmem:[%s1 + $0x10] sm:$0xff]
        %v287 = vld [vmem:[%s1 + $0x18] sm:$0xff]
        %v288 = vld [vmem:[%s1 + $0x20] sm:$0xff]
        %v289 = vld [vmem:[%s1 + $0x28] sm:$0xff]
        %v290 = vld [vmem:[%s1 + $0x30] sm:$0xff]
        %v291 = vld [vmem:[%s1 + $0x38] sm:$0xff]
        %v292 = vld [vmem:[%s1 + $0x40] sm:$0xff]
        %v293 = vld [vmem:[%s1 + $0x48] sm:$0xff]
        %v294 = vld [vmem:[%s1 + $0x50] sm:$0xff]
        %v295 = vld [vmem:[%s1 + $0x58] sm:$0xff]
        %v296 = vld [vmem:[%s1 + $0x60] sm:$0xff]
        %v297 = vld [vmem:[%s1 + $0x68] sm:$0xff]
        %v298 = vld [vmem:[%s1 + $0x70] sm:$0xff]
        %v299 = vld [vmem:[%s1 + $0x78] sm:$0xff]
        %v300 = vld [vmem:[%s2] sm:$0xff]
        %v301 = vld [vmem:[%s2 + $0x8] sm:$0xff]
        %v302 = vld [vmem:[%s2 + $0x10] sm:$0xff]
        %v303 = vld [vmem:[%s2 + $0x18] sm:$0xff]
        %vm304 = vcmask 269312
        %v306 = vsel %vm304, %v284, 0
        %v309 = vsel %vm304, %v285, 0
        %v312 = vsel %vm304, %v286, 0
        %v315 = vsel %vm304, %v287, 0
        %v318 = vsel %vm304, %v288, 0
        %v321 = vsel %vm304, %v289, 0
        %v324 = vsel %vm304, %v290, 0
        %v327 = vsel %vm304, %v291, 0
        %v330 = vsel %vm304, %v292, 0
        %v333 = vsel %vm304, %v293, 0
        %v336 = vsel %vm304, %v294, 0
        %v339 = vsel %vm304, %v295, 0
        %v342 = vsel %vm304, %v296, 0
        %v345 = vsel %vm304, %v297, 0
        %v348 = vsel %vm304, %v298, 0
        %v351 = vsel %vm304, %v299, 0
        %vm353 = vcmask 1040384
        %v355 = vsel %vm353, 1.0, 0
        %357 = vmatpush.msra.mxu0 0.0
        %358 = vmatpush.msra.mxu0 0.0
        %359 = vmatpush.msra.mxu0 0.0
        %360 = vmatpush.msra.mxu0 0.0
        %361 = vmatpush.msra.mxu0 0.0
        %362 = vmatpush.msra.mxu0 0.0
        %363 = vmatpush.msra.mxu0 0.0
        %364 = vmatpush.msra.mxu0 0.0
        %365 = vmatpush.msra.mxu0 0.0
        %366 = vmatpush.msra.mxu0 0.0
        %367 = vmatpush.msra.mxu0 0.0
        %368 = vmatpush.msra.mxu0 %v355
        %369 = vmatpush.msra.mxu0 %v283
        %370 = vmatpush.msra.mxu0 %v282
        %371 = vmatpush.msra.mxu0 %v281
        %372 = vmatpush.msra.mxu0 %v280
        %373 = vmatmul.f32.gmra.mxu0 %v306
        %v374 = vpop.f32.mrf.mxu0
        %v375 = vadd.f32 0.0, %v374
        %376 = vmatmul.f32.gmra.mxu0 %v309
        %v377 = vpop.f32.mrf.mxu0
        %v378 = vadd.f32 0.0, %v377
        %379 = vmatmul.f32.gmra.mxu0 %v312
        %v380 = vpop.f32.mrf.mxu0
        %v381 = vadd.f32 0.0, %v380
        %382 = vmatmul.f32.gmra.mxu0 %v315
        %v383 = vpop.f32.mrf.mxu0
        %v384 = vadd.f32 0.0, %v383
        %385 = vmatmul.f32.gmra.mxu0 %v318
        %v386 = vpop.f32.mrf.mxu0
        %v387 = vadd.f32 0.0, %v386
        %388 = vmatmul.f32.gmra.mxu0 %v321
        %v389 = vpop.f32.mrf.mxu0
        %v390 = vadd.f32 0.0, %v389
        %391 = vmatmul.f32.gmra.mxu0 %v324
        %v392 = vpop.f32.mrf.mxu0
        %v393 = vadd.f32 0.0, %v392
        %394 = vmatmul.f32.gmra.mxu0 %v327
        %v395 = vpop.f32.mrf.mxu0
        %v396 = vadd.f32 0.0, %v395
        %397 = vmatmul.f32.gmra.mxu0 %v330
        %v398 = vpop.f32.mrf.mxu0
        %v399 = vadd.f32 0.0, %v398
        %400 = vmatmul.f32.gmra.mxu0 %v333
        %v401 = vpop.f32.mrf.mxu0
        %v402 = vadd.f32 0.0, %v401
        %403 = vmatmul.f32.gmra.mxu0 %v336
        %v404 = vpop.f32.mrf.mxu0
        %v405 = vadd.f32 0.0, %v404
        %406 = vmatmul.f32.gmra.mxu0 %v339
        %v407 = vpop.f32.mrf.mxu0
        %v408 = vadd.f32 0.0, %v407
        %409 = vmatmul.f32.gmra.mxu0 %v342
        %v410 = vpop.f32.mrf.mxu0
        %v411 = vadd.f32 0.0, %v410
        %412 = vmatmul.f32.gmra.mxu0 %v345
        %v413 = vpop.f32.mrf.mxu0
        %v414 = vadd.f32 0.0, %v413
        %415 = vmatmul.f32.gmra.mxu0 %v348
        %v416 = vpop.f32.mrf.mxu0
        %v417 = vadd.f32 0.0, %v416
        %418 = vmatmul.f32.gmra.mxu0 %v351
        %v419 = vpop.f32.mrf.mxu0
        %v420 = vadd.f32 0.0, %v419
        %421 = vdwg.mxu0
        %vm422 = vcmask 64512
        %v423 = vsel %vm422, %v375, inf
        %v424 = vsel %vm422, %v378, inf
        %v425 = vsel %vm422, %v381, inf
        %v426 = vsel %vm422, %v384, inf
        %v427 = vsel %vm422, %v387, inf
        %v428 = vmin.f32 %v423, %v427
        %v429 = vsel %vm422, %v390, inf
        %v430 = vmin.f32 %v424, %v429
        %v431 = vsel %vm422, %v393, inf
        %v432 = vmin.f32 %v425, %v431
        %v433 = vsel %vm422, %v396, inf
        %v434 = vmin.f32 %v426, %v433
        %v435 = vsel %vm422, %v399, inf
        %v436 = vmin.f32 %v428, %v435
        %v437 = vsel %vm422, %v402, inf
        %v438 = vmin.f32 %v430, %v437
        %v439 = vsel %vm422, %v405, inf
        %v440 = vmin.f32 %v432, %v439
        %v441 = vsel %vm422, %v408, inf
        %v442 = vmin.f32 %v434, %v441
        %v443 = vsel %vm422, %v411, inf
        %v444 = vmin.f32 %v436, %v443
        %v445 = vsel %vm422, %v414, inf
        %v446 = vmin.f32 %v438, %v445
        %v447 = vsel %vm422, %v417, inf
        %v448 = vmin.f32 %v440, %v447
        %v449 = vsel %vm422, %v420, inf
        %v450 = vmin.f32 %v442, %v449
        %v451 = vmin.f32 %v444, %v446
        %v452 = vmin.f32 %v448, %v450
        %v453 = vmin.f32 %v451, %v452
        %v454 = vrot.slane %v453, 4
        %v455 = vmin.f32 %v453, %v454
        %v456 = vrot.slane %v455, 2
        %v457 = vmin.f32 %v455, %v456
        %v458 = vrot.slane %v457, 1
        %v459 = vmin.f32 %v457, %v458
        %v460 = vlaneseq
        %v461 = vshrl.u32 %v460, 7
        %v462 = vadd.s32 %v461, 8
        %v463 = vadd.s32 %v461, 16
        %v464 = vadd.s32 %v461, 24
        %v465 = vadd.s32 %v461, 32
        %v466 = vadd.s32 %v461, 40
        %v467 = vadd.s32 %v461, 48
        %v468 = vadd.s32 %v461, 56
        %v469 = vadd.s32 %v461, 64
        %v470 = vadd.s32 %v461, 72
        %v471 = vadd.s32 %v461, 80
        %v472 = vadd.s32 %v461, 88
        %v473 = vadd.s32 %v461, 96
        %v474 = vadd.s32 %v461, 104
        %v475 = vadd.s32 %v461, 112
        %v476 = vadd.s32 %v461, 120
        %vm477 = vcmp.eq.f32.partialorder %v375, %v459
        %vm478 = vcmp.eq.f32.partialorder %v378, %v459
        %vm479 = vcmp.eq.f32.partialorder %v381, %v459
        %vm480 = vcmp.eq.f32.partialorder %v384, %v459
        %vm481 = vcmp.eq.f32.partialorder %v387, %v459
        %vm482 = vcmp.eq.f32.partialorder %v390, %v459
        %vm483 = vcmp.eq.f32.partialorder %v393, %v459
        %vm484 = vcmp.eq.f32.partialorder %v396, %v459
        %vm485 = vcmp.eq.f32.partialorder %v399, %v459
        %vm486 = vcmp.eq.f32.partialorder %v402, %v459
        %vm487 = vcmp.eq.f32.partialorder %v405, %v459
        %vm488 = vcmp.eq.f32.partialorder %v408, %v459
        %vm489 = vcmp.eq.f32.partialorder %v411, %v459
        %vm490 = vcmp.eq.f32.partialorder %v414, %v459
        %vm491 = vcmp.eq.f32.partialorder %v417, %v459
        %vm492 = vcmp.eq.f32.partialorder %v420, %v459
        %v493 = vsel %vm477, %v461, 128
        %v494 = vsel %vm478, %v462, 128
        %v495 = vsel %vm479, %v463, 128
        %v496 = vsel %vm480, %v464, 128
        %v497 = vsel %vm481, %v465, 128
        %v498 = vsel %vm482, %v466, 128
        %v499 = vsel %vm483, %v467, 128
        %v500 = vsel %vm484, %v468, 128
        %v501 = vsel %vm485, %v469, 128
        %v502 = vsel %vm486, %v470, 128
        %v503 = vsel %vm487, %v471, 128
        %v504 = vsel %vm488, %v472, 128
        %v505 = vsel %vm489, %v473, 128
        %v506 = vsel %vm490, %v474, 128
        %v507 = vsel %vm491, %v475, 128
        %v508 = vsel %vm492, %v476, 128
        %v509 = vsel %vm422, %v493, 2147483647
        %v510 = vsel %vm422, %v494, 2147483647
        %v511 = vsel %vm422, %v495, 2147483647
        %v512 = vsel %vm422, %v496, 2147483647
        %v513 = vsel %vm422, %v497, 2147483647
        %vm514 = vcmp.lt.s32.totalorder %v509, %v513
        %v515 = vsel %vm514, %v509, %v513
        %v516 = vsel %vm422, %v498, 2147483647
        %vm517 = vcmp.lt.s32.totalorder %v510, %v516
        %v518 = vsel %vm517, %v510, %v516
        %v519 = vsel %vm422, %v499, 2147483647
        %vm520 = vcmp.lt.s32.totalorder %v511, %v519
        %v521 = vsel %vm520, %v511, %v519
        %v522 = vsel %vm422, %v500, 2147483647
        %vm523 = vcmp.lt.s32.totalorder %v512, %v522
        %v524 = vsel %vm523, %v512, %v522
        %v525 = vsel %vm422, %v501, 2147483647
        %vm526 = vcmp.lt.s32.totalorder %v515, %v525
        %v527 = vsel %vm526, %v515, %v525
        %v528 = vsel %vm422, %v502, 2147483647
        %vm529 = vcmp.lt.s32.totalorder %v518, %v528
        %v530 = vsel %vm529, %v518, %v528
        %v531 = vsel %vm422, %v503, 2147483647
        %vm532 = vcmp.lt.s32.totalorder %v521, %v531
        %v533 = vsel %vm532, %v521, %v531
        %v534 = vsel %vm422, %v504, 2147483647
        %vm535 = vcmp.lt.s32.totalorder %v524, %v534
        %v536 = vsel %vm535, %v524, %v534
        %v537 = vsel %vm422, %v505, 2147483647
        %vm538 = vcmp.lt.s32.totalorder %v527, %v537
        %v539 = vsel %vm538, %v527, %v537
        %v540 = vsel %vm422, %v506, 2147483647
        %vm541 = vcmp.lt.s32.totalorder %v530, %v540
        %v542 = vsel %vm541, %v530, %v540
        %v543 = vsel %vm422, %v507, 2147483647
        %vm544 = vcmp.lt.s32.totalorder %v533, %v543
        %v545 = vsel %vm544, %v533, %v543
        %v546 = vsel %vm422, %v508, 2147483647
        %vm547 = vcmp.lt.s32.totalorder %v536, %v546
        %v548 = vsel %vm547, %v536, %v546
        %vm549 = vcmp.lt.s32.totalorder %v539, %v542
        %v550 = vsel %vm549, %v539, %v542
        %vm551 = vcmp.lt.s32.totalorder %v545, %v548
        %v552 = vsel %vm551, %v545, %v548
        %vm553 = vcmp.lt.s32.totalorder %v550, %v552
        %v554 = vsel %vm553, %v550, %v552
        %v555 = vrot.slane %v554, 4
        %vm556 = vcmp.lt.s32.totalorder %v554, %v555
        %v557 = vsel %vm556, %v554, %v555
        %v558 = vrot.slane %v557, 2
        %vm559 = vcmp.lt.s32.totalorder %v557, %v558
        %v560 = vsel %vm559, %v557, %v558
        %v561 = vrot.slane %v560, 1
        %vm562 = vcmp.lt.s32.totalorder %v560, %v561
        %v563 = vsel %vm562, %v560, %v561
        %vm564 = vcmask 57344
        %565 = vst.msk [vmem:[%s256] sm:$0x1] %vm564, %v563
        %vm566 = vcmp.eq.s32.totalorder %v461, %v563
        %vm567 = vcmp.eq.s32.totalorder %v462, %v563
        %vm568 = vcmp.eq.s32.totalorder %v463, %v563
        %vm569 = vcmp.eq.s32.totalorder %v464, %v563
        %vm570 = vcmp.eq.s32.totalorder %v465, %v563
        %vm571 = vcmp.eq.s32.totalorder %v466, %v563
        %vm572 = vcmp.eq.s32.totalorder %v467, %v563
        %vm573 = vcmp.eq.s32.totalorder %v468, %v563
        %vm574 = vcmp.eq.s32.totalorder %v469, %v563
        %vm575 = vcmp.eq.s32.totalorder %v470, %v563
        %vm576 = vcmp.eq.s32.totalorder %v471, %v563
        %vm577 = vcmp.eq.s32.totalorder %v472, %v563
        %vm578 = vcmp.eq.s32.totalorder %v473, %v563
        %vm579 = vcmp.eq.s32.totalorder %v474, %v563
        %vm580 = vcmp.eq.s32.totalorder %v475, %v563
        %vm581 = vcmp.eq.s32.totalorder %v476, %v563
        %v582 = vsel %vm566, 1, 0
        %v583 = vsel %vm567, 1, 0
        %v584 = vsel %vm568, 1, 0
        %v585 = vsel %vm569, 1, 0
        %v586 = vsel %vm570, 1, 0
        %v587 = vsel %vm571, 1, 0
        %v588 = vsel %vm572, 1, 0
        %v589 = vsel %vm573, 1, 0
        %v590 = vsel %vm574, 1, 0
        %v591 = vsel %vm575, 1, 0
        %v592 = vsel %vm576, 1, 0
        %v593 = vsel %vm577, 1, 0
        %v594 = vsel %vm578, 1, 0
        %v595 = vsel %vm579, 1, 0
        %v596 = vsel %vm580, 1, 0
        %v597 = vsel %vm581, 1, 0
        %v598 = vcvt.s32.f32 %v582
        %v599 = vcvt.s32.f32 %v583
        %v600 = vcvt.s32.f32 %v584
        %v601 = vcvt.s32.f32 %v585
        %v602 = vcvt.s32.f32 %v586
        %v603 = vcvt.s32.f32 %v587
        %v604 = vcvt.s32.f32 %v588
        %v605 = vcvt.s32.f32 %v589
        %v606 = vcvt.s32.f32 %v590
        %v607 = vcvt.s32.f32 %v591
        %v608 = vcvt.s32.f32 %v592
        %v609 = vcvt.s32.f32 %v593
        %v610 = vcvt.s32.f32 %v594
        %v611 = vcvt.s32.f32 %v595
        %v612 = vcvt.s32.f32 %v596
        %v613 = vcvt.s32.f32 %v597
        %614 = vmatpush.msra.mxu0 %v613
        %615 = vmatpush.msra.mxu0 %v612
        %616 = vmatpush.msra.mxu0 %v611
        %617 = vmatpush.msra.mxu0 %v610
        %618 = vmatpush.msra.mxu0 %v609
        %619 = vmatpush.msra.mxu0 %v608
        %620 = vmatpush.msra.mxu0 %v607
        %621 = vmatpush.msra.mxu0 %v606
        %622 = vmatpush.msra.mxu0 %v605
        %623 = vmatpush.msra.mxu0 %v604
        %624 = vmatpush.msra.mxu0 %v603
        %625 = vmatpush.msra.mxu0 %v602
        %626 = vmatpush.msra.mxu0 %v601
        %627 = vmatpush.msra.mxu0 %v600
        %628 = vmatpush.msra.mxu0 %v599
        %629 = vmatpush.msra.mxu0 %v598
        %630 = vmatmul.f32.gmra.mxu0 %v300
        %v631 = vpop.f32.mrf.mxu0
        %v632 = vadd.f32 0.0, %v631
        %633 = vmatmul.f32.gmra.mxu0 %v301
        %v634 = vpop.f32.mrf.mxu0
        %v635 = vadd.f32 0.0, %v634
        %636 = vmatmul.f32.gmra.mxu0 %v302
        %v637 = vpop.f32.mrf.mxu0
        %v638 = vadd.f32 0.0, %v637
        %639 = vmatmul.f32.gmra.mxu0 %v303
        %v640 = vpop.f32.mrf.mxu0
        %v641 = vadd.f32 0.0, %v640
        %642 = vdwg.mxu0
        %643 = vst.msk [vmem:[%s279] sm:$0xff] %vm422, %v632
        %644 = vst.msk [vmem:[%s279 + $0x8] sm:$0xff] %vm422, %v635
        %645 = vst.msk [vmem:[%s279 + $0x10] sm:$0xff] %vm422, %v638
        %646 = vst.msk [vmem:[%s279 + $0x18] sm:$0xff] %vm422, %v641
        %v647 = vsub.f32 %v632, %v280
        %v648 = vsub.f32 %v635, %v281
        %v649 = vsub.f32 %v638, %v282
        %v650 = vsub.f32 %v641, %v283
        %v651 = vsel %vm422, %v598, 0.0
        %652 = vadd.xlane.f32.xlu0 %v651
        %v653 = vpop.xlane.xlu0 %652
        %v654 = vsel %vm422, %v599, 0.0
        %655 = vadd.xlane.f32.xlu0 %v654
        %v656 = vpop.xlane.xlu0 %655
        %v657 = vsel %vm422, %v600, 0.0
        %658 = vadd.xlane.f32.xlu0 %v657
        %v659 = vpop.xlane.xlu0 %658
        %v660 = vsel %vm422, %v601, 0.0
        %661 = vadd.xlane.f32.xlu0 %v660
        %v662 = vpop.xlane.xlu0 %661
        %v663 = vsel %vm422, %v602, 0.0
        %664 = vadd.xlane.f32.xlu0 %v663
        %v665 = vpop.xlane.xlu0 %664
        %v666 = vsel %vm422, %v603, 0.0
        %667 = vadd.xlane.f32.xlu0 %v666
        %v668 = vpop.xlane.xlu0 %667
        %v669 = vsel %vm422, %v604, 0.0
        %670 = vadd.xlane.f32.xlu0 %v669
        %v671 = vpop.xlane.xlu0 %670
        %v672 = vsel %vm422, %v605, 0.0
        %673 = vadd.xlane.f32.xlu0 %v672
        %v674 = vpop.xlane.xlu0 %673
        %v675 = vsel %vm422, %v606, 0.0
        %676 = vadd.xlane.f32.xlu0 %v675
        %v677 = vpop.xlane.xlu0 %676
        %v678 = vsel %vm422, %v607, 0.0
        %679 = vadd.xlane.f32.xlu0 %v678
        %v680 = vpop.xlane.xlu0 %679
        %v681 = vsel %vm422, %v608, 0.0
        %682 = vadd.xlane.f32.xlu0 %v681
        %v683 = vpop.xlane.xlu0 %682
        %v684 = vsel %vm422, %v609, 0.0
        %685 = vadd.xlane.f32.xlu0 %v684
        %v686 = vpop.xlane.xlu0 %685
        %v687 = vsel %vm422, %v610, 0.0
        %688 = vadd.xlane.f32.xlu0 %v687
        %v689 = vpop.xlane.xlu0 %688
        %v690 = vsel %vm422, %v611, 0.0
        %691 = vadd.xlane.f32.xlu0 %v690
        %v692 = vpop.xlane.xlu0 %691
        %v693 = vsel %vm422, %v612, 0.0
        %694 = vadd.xlane.f32.xlu0 %v693
        %v695 = vpop.xlane.xlu0 %694
        %v696 = vsel %vm422, %v613, 0.0
        %697 = vadd.xlane.f32.xlu0 %v696
        %v698 = vpop.xlane.xlu0 %697
        %v715 = vlaneseq
        %v716 = vand.u32 %v715, 127
        %v717 = vperm.slane %v653, %v716
        %v718 = vadd.s32 %v716, 4294967288
        %v719 = vperm.slane %v656, %v718
        %vm720 = vcmask 130112
        %v721 = vsel %vm720, %v719, %v717
        %v722 = vadd.s32 %v716, 4294967280
        %v723 = vperm.slane %v659, %v722
        %vm724 = vcmask 195712
        %v725 = vsel %vm724, %v723, %v721
        %v726 = vadd.s32 %v716, 4294967272
        %v727 = vperm.slane %v662, %v726
        %vm728 = vcmask 261312
        %v729 = vsel %vm728, %v727, %v725
        %v730 = vadd.s32 %v716, 4294967264
        %v731 = vperm.slane %v665, %v730
        %vm732 = vcmask 326912
        %v733 = vsel %vm732, %v731, %v729
        %v734 = vadd.s32 %v716, 4294967256
        %v735 = vperm.slane %v668, %v734
        %vm736 = vcmask 392512
        %v737 = vsel %vm736, %v735, %v733
        %v738 = vadd.s32 %v716, 4294967248
        %v739 = vperm.slane %v671, %v738
        %vm740 = vcmask 458112
        %v741 = vsel %vm740, %v739, %v737
        %v742 = vadd.s32 %v716, 4294967240
        %v743 = vperm.slane %v674, %v742
        %vm744 = vcmask 523712
        %v745 = vsel %vm744, %v743, %v741
        %v746 = vadd.s32 %v716, 4294967232
        %v747 = vperm.slane %v677, %v746
        %vm748 = vcmask 589312
        %v749 = vsel %vm748, %v747, %v745
        %v750 = vadd.s32 %v716, 4294967224
        %v751 = vperm.slane %v680, %v750
        %vm752 = vcmask 654912
        %v753 = vsel %vm752, %v751, %v749
        %v754 = vadd.s32 %v716, 4294967216
        %v755 = vperm.slane %v683, %v754
        %vm756 = vcmask 720512
        %v757 = vsel %vm756, %v755, %v753
        %v758 = vadd.s32 %v716, 4294967208
        %v759 = vperm.slane %v686, %v758
        %vm760 = vcmask 786112
        %v761 = vsel %vm760, %v759, %v757
        %v762 = vadd.s32 %v716, 4294967200
        %v763 = vperm.slane %v689, %v762
        %vm764 = vcmask 851712
        %v765 = vsel %vm764, %v763, %v761
        %v766 = vadd.s32 %v716, 4294967192
        %v767 = vperm.slane %v692, %v766
        %vm768 = vcmask 917312
        %v769 = vsel %vm768, %v767, %v765
        %v770 = vadd.s32 %v716, 4294967184
        %v771 = vperm.slane %v695, %v770
        %vm772 = vcmask 982912
        %v773 = vsel %vm772, %v771, %v769
        %v774 = vadd.s32 %v716, 4294967176
        %v775 = vperm.slane %v698, %v774
        %vm776 = vcmask 1048512
        %v777 = vsel %vm776, %v775, %v773
        %779 = vst [vmem:[%s263] sm:$0x1] %v777
        %vm780 = vcmp.eq.s32.totalorder %v716, 0
        %v781 = vmul.f32 %v647, %v647
        %v782 = vmul.f32 %v648, %v648
        %v783 = vmul.f32 %v649, %v649
        %v784 = vmul.f32 %v650, %v650
        %v785 = vsel %vm422, %v781, 0.0
        %v786 = vsel %vm422, %v782, 0.0
        %v787 = vadd.f32 %v785, %v786
        %v788 = vsel %vm422, %v783, 0.0
        %v789 = vadd.f32 %v787, %v788
        %v790 = vsel %vm422, %v784, 0.0
        %v791 = vadd.f32 %v789, %v790
        %792 = vadd.xlane.f32.xlu0 %v791
        %v793 = vpop.xlane.xlu0 %792
        %v794 = vrot.slane %v793, 4
        %v795 = vadd.f32 %v793, %v794
        %v796 = vrot.slane %v795, 2
        %v797 = vadd.f32 %v795, %v796
        %v798 = vrot.slane %v797, 1
        %v799 = vadd.f32 %v797, %v798
        %s800 = vtos %v799
        %v801 = vstv %s800
        %v802 = vsel %vm780, %v801, 0.0
        %803 = vst [vmem:[%s263 + $0x1] sm:$0x1] %v802
        %p804 = scmp.lt.s32.totalorder %s27, 1
        %s805 = scalar_select %p804, %s27, 1
        %p806 = scmp.lt.s32.totalorder %s28, 0
        %s807 = scalar_select %p806, %s28, 0
        %s808 = smul.addr %s805, 4
        %s809 = sadd.s32 %s807, %s808
        %s810 = smul.addr %s809, 8
        %s811 = scalar_lea.vmem %s3, %s810
        %s812 = sand.u32 %s143, 1
        %s813 = scalar_lea.sflag [#allocation3], %s812
        %s814 = sand.u32 %s143, 1
        %s815 = scalar_lea.vmem [#allocation2], %s814
        %s816 = sand.u32 %s171, 1
        %s817 = scalar_lea.sflag [#allocation5], %s816
        %s818 = sand.u32 %s171, 1
        %s819 = smul.addr %s818, 2
        %s820 = scalar_lea.vmem [#allocation4], %s819
        // Predicated region
        $region33: #{tpu_custom_call.1} parent=31 // pred_check
          %p821 = pneg %p125
        $region34: #{tpu_custom_call.1} parent=31 // pred_check_branch
          %823 = sbr.rel (%p821) target = $region36
        $region35: #{tpu_custom_call.1} parent=31 // pred_region
          _
        $region36: #{tpu_custom_call.1} parent=31 // pred_fallthru
          _
        // Predicated region
        $region37: #{tpu_custom_call.1} parent=31 // pred_check
          %p824 = pneg %p153
        $region38: #{tpu_custom_call.1} parent=31 // pred_check_branch
          %826 = sbr.rel (%p824) target = $region40
        $region39: #{tpu_custom_call.1} parent=31 // pred_region
          %828 = vsyncadd %s813, 0
          %s829 = sadd.s32 %s28, %s27
          %s830 = scalar_lea.hbm %s4, %s829
          %s832 = sshll.u32 %s815, 4
          %s833 = int_to_ptr.vmem [resolvable:$true] %s832
          %s834 = sshll.u32 %s830, 4
          %s835 = int_to_ptr.hbm [resolvable:$true] %s834
          %837 = dma.vmem_to_hbm [thread:$0]  %s833, 16, %s835, %s813
        $region40: #{tpu_custom_call.1} parent=31 // pred_fallthru
          _
        // Predicated region
        $region41: #{tpu_custom_call.1} parent=31 // pred_check
          %p838 = pneg %p181
        $region42: #{tpu_custom_call.1} parent=31 // pred_check_branch
          %840 = sbr.rel (%p838) target = $region44
        $region43: #{tpu_custom_call.1} parent=31 // pred_region
          %842 = vsyncadd %s817, 0
          %s843 = sadd.s32 %s28, %s27
          %s844 = smul.addr %s843, 2
          %s845 = scalar_lea.hbm %s5, %s844
          %s847 = sshll.u32 %s820, 4
          %s848 = int_to_ptr.vmem [resolvable:$true] %s847
          %s849 = sshll.u32 %s845, 4
          %s850 = int_to_ptr.hbm [resolvable:$true] %s849
          %852 = dma.vmem_to_hbm [thread:$0]  %s848, 32, %s850, %s817
        $region44: #{tpu_custom_call.1} parent=31 // pred_fallthru
          _
      $region32: #{tpu_custom_call.1} parent=5 // pred_fallthru
        _
      %p853 = scmp.le.s32.totalorder 2, %s18
      // Predicated region
      $region45: #{tpu_custom_call.1} parent=5 // pred_check
        %p854 = pneg %p853
      $region46: #{tpu_custom_call.1} parent=5 // pred_check_branch
        %856 = sbr.rel (%p854) target = $region48
      $region47: #{tpu_custom_call.1} parent=5 // pred_region
        %s857 = ssub.s32 %s18, 2
        // Predicated region
        $region49: #{tpu_custom_call.1} parent=47 // pred_check
          %p858 = pneg %p131
        $region50: #{tpu_custom_call.1} parent=47 // pred_check_branch
          %860 = sbr.rel (%p858) target = $region52
        $region51: #{tpu_custom_call.1} parent=47 // pred_region
          %p861 = scmp.lt.s32.totalorder %s29, 1
          %s862 = scalar_select %p861, %s29, 1
          %p863 = scmp.lt.s32.totalorder %s30, 0
          %s864 = scalar_select %p863, %s30, 0
          %s865 = smul.addr %s862, 4
          %s866 = sadd.s32 %s864, %s865
          %s867 = smul.addr %s866, 8
          %s868 = scalar_lea.vmem %s3, %s867
        $region52: #{tpu_custom_call.1} parent=47 // pred_fallthru
          _
        // Predicated region
        $region53: #{tpu_custom_call.1} parent=47 // pred_check
          %p869 = pneg %p159
        $region54: #{tpu_custom_call.1} parent=47 // pred_check_branch
          %871 = sbr.rel (%p869) target = $region56
        $region55: #{tpu_custom_call.1} parent=47 // pred_region
          %s872 = sand.u32 %s144, 1
          %s873 = scalar_lea.sflag [#allocation3], %s872
          %s874 = sand.u32 %s144, 1
          %s875 = scalar_lea.vmem [#allocation2], %s874
          %877 = dma.done %s873, 16
        $region56: #{tpu_custom_call.1} parent=47 // pred_fallthru
          _
        // Predicated region
        $region57: #{tpu_custom_call.1} parent=47 // pred_check
          %p878 = pneg %p187
        $region58: #{tpu_custom_call.1} parent=47 // pred_check_branch
          %880 = sbr.rel (%p878) target = $region60
        $region59: #{tpu_custom_call.1} parent=47 // pred_region
          %s881 = sand.u32 %s172, 1
          %s882 = scalar_lea.sflag [#allocation5], %s881
          %s883 = sand.u32 %s172, 1
          %s884 = smul.addr %s883, 2
          %s885 = scalar_lea.vmem [#allocation4], %s884
          %887 = dma.done %s882, 32
        $region60: #{tpu_custom_call.1} parent=47 // pred_fallthru
          _
      $region48: #{tpu_custom_call.1} parent=5 // pred_fallthru
        _
    $region6: #{tpu_custom_call.1} parent=1 // loop_footer
      %s22 = sadd.s32 1, %s18
    $region7: #{tpu_custom_call.1} parent=1 // loop_footer_branch
      %17 = sbr.rel target = $region3
    $region8: #{tpu_custom_call.1} parent=1 // loop_exit
      _
    %888 = vsyncpa [#allocation3], 1
    %s889 = scalar_lea.sflag [#allocation3], 1
    %890 = vsyncpa %s889, 1
    %891 = vsyncpa [#allocation5], 1
    %s892 = scalar_lea.sflag [#allocation5], 1
    %893 = vsyncpa %s892, 1

</llo_original>
